<compile_context>
chip_gen: v5e
topology: v5e:2x2
jax: 0.10.0
libtpu: 0.0.40
codegen_flags: <defaults>
</compile_context>

<pallas_src>
import jax
import jax.numpy as jnp
from jax import lax
from jax.experimental import pallas as pl
from jax.experimental.pallas import tpu as pltpu

# ----------------------------- config ---------------------------------------
B = 2             # batch
S = 8             # sequence length
H = 32            # encoder / expert hidden size
E = 3             # number of experts
NUM_LABELS = 3    # num_labels=3 in the reference module
VOCAB = 16
L_PAD = 128       # lane-dense padded logits width (sliced to NUM_LABELS in wrapper)
BS = B * S
EH = E * H

# ---- weight-slab row layout (every block start aligned to 8 sublanes) -------
R_EMB = 0                     # embedding   (VOCAB, H)
R_WENC = 16                   # w_enc       (H, H)
R_BENC = 48                   # b_enc       (1, H)
R_WGATE = 56                  # w_gate      (H, E)
R_BGATE = 88                  # b_gate      (1, E)
R_WEXP = 96                   # w_exp_flat  (H, E*H)   experts stacked column-wise
R_BEXP = 128                  # b_exp_flat  (1, E*H)
R_WHEAD = 136                 # w_head_flat (E*H, L_PAD) heads stacked, lane-padded
R_BHEAD = 232                 # b_head_pad  (E, L_PAD)
R_TOTAL = 240                 # slab rows (x 128 lanes, f32 -> 120 KiB)

# data-slab column layout: col 0 = ids (as f32), col 1 = normalized mask,
# cols 4..4+E (rows 0..B-1) = gumbel noise.
C_IDS = 0
C_MASK = 1
C_GUM = 4


# ----------------------------- kernel ---------------------------------------
def moe_kernel(data_ref, w_ref, out_ref):
    """Fused MoE-classifier forward.

    data_ref: (B*S, 128) f32 packed ids / normalized mask / gumbel noise
    w_ref:    (240, 128) f32 packed weights (see row-layout constants above)
    out_ref:  (B, 128)   f32 lane-dense logits (first NUM_LABELS cols valid)
    """
    f32 = jnp.float32

    # ---- unpack data slab (static slices of the VMEM ref) -------------------
    ids = data_ref[:, C_IDS:C_IDS + 1].astype(jnp.int32)          # (B*S, 1)
    maskn = data_ref[:, C_MASK:C_MASK + 1]                        # (B*S, 1) mask/sum
    gumbel = data_ref[0:B, C_GUM:C_GUM + E]                       # (B, E)

    # ---- unpack weight slab (static, 8-row-aligned slices) ------------------
    emb = w_ref[R_EMB:R_EMB + VOCAB, :H]                          # (VOCAB, H)
    w_enc = w_ref[R_WENC:R_WENC + H, :H]                          # (H, H)
    b_enc = w_ref[R_BENC:R_BENC + 1, :H]                          # (1, H)
    w_gate = w_ref[R_WGATE:R_WGATE + H, :E]                       # (H, E)
    b_gate = w_ref[R_BGATE:R_BGATE + 1, :E]                       # (1, E)
    w_exp = w_ref[R_WEXP:R_WEXP + H, :EH]                         # (H, E*H)
    b_exp = w_ref[R_BEXP:R_BEXP + 1, :EH]                         # (1, E*H)
    w_head = w_ref[R_WHEAD:R_WHEAD + EH, :]                       # (E*H, L_PAD)
    b_head = w_ref[R_BHEAD:R_BHEAD + E, :]                        # (E, L_PAD)

    # ---- fused embedding lookup: one_hot(ids) @ emb on the MXU (exact) ------
    onehot = (ids == lax.broadcasted_iota(jnp.int32, (BS, VOCAB), 1)).astype(f32)
    x = jnp.dot(onehot, emb, preferred_element_type=f32)          # (B*S, H)

    # ---- constant selection matrices generated in-kernel (iota compares) ----
    iota_tok = lax.broadcasted_iota(jnp.int32, (B, BS), 1)
    iota_row = lax.broadcasted_iota(jnp.int32, (B, BS), 0)
    cls_sel = (iota_tok == iota_row * S).astype(f32)              # (B, B*S) picks token 0
    pool_sel = ((iota_tok >= iota_row * S)
                & (iota_tok < (iota_row + 1) * S)).astype(f32)    # (B, B*S) row-sum
    iota_col = lax.broadcasted_iota(jnp.int32, (E, EH), 1)
    iota_exp = lax.broadcasted_iota(jnp.int32, (E, EH), 0)
    expand = ((iota_col >= iota_exp * H)
              & (iota_col < (iota_exp + 1) * H)).astype(f32)      # (E, E*H)

    # ---- frozen encoder CLS + gate (hard gumbel-softmax, forward one-hot) ---
    cls_in = jnp.dot(cls_sel, x, preferred_element_type=f32)      # (B, H)
    cls_embed = jnp.tanh(jnp.dot(cls_in, w_enc, preferred_element_type=f32) + b_enc)
    noisy = (jnp.dot(cls_embed, w_gate, preferred_element_type=f32)
             + b_gate + gumbel)                                   # (B, E), tau=1
    iota_e = lax.broadcasted_iota(jnp.int32, (B, E), 1)
    max_v = jnp.max(noisy, axis=-1, keepdims=True)
    # first-argmax tie break (matches torch.argmax semantics)
    sel = jnp.min(jnp.where(noisy == max_v, iota_e, E), axis=-1, keepdims=True)
    gate = (iota_e == sel).astype(f32)                            # (B, E) one-hot

    # ---- ALL experts in one wide matmul + one tanh ---------------------------
    h = jnp.tanh(jnp.dot(x, w_exp, preferred_element_type=f32) + b_exp)   # (B*S, E*H)

    # ---- masked mean pooling: mask pre-normalized -> single MXU contraction --
    pooled = jnp.dot(pool_sel, h * maskn, preferred_element_type=f32)     # (B, E*H)

    # ---- gated combine + single stacked classifier head ----------------------
    gate_wide = jnp.dot(gate, expand, preferred_element_type=f32)         # (B, E*H)
    logits = (jnp.dot(pooled * gate_wide, w_head, preferred_element_type=f32)
              + jnp.dot(gate, b_head, preferred_element_type=f32))        # (B, L_PAD)
    out_ref[...] = logits                                                 # lane-dense store


# ----------------------------- wrapper ---------------------------------------
def prepare_params(params):
    """One-time packing of all weights into a single lane-dense VMEM slab."""
    # experts stacked column-wise: w_exp_flat[:, e*H + j] = w_exp[e, :, j]
    w_exp_flat = jnp.transpose(params["w_exp"], (1, 0, 2)).reshape(H, EH)
    b_exp_flat = params["b_exp"].reshape(1, EH)
    w_head_flat = params["w_head"].reshape(EH, NUM_LABELS)       # row index = e*H + h

    slab = jnp.zeros((R_TOTAL, L_PAD), jnp.float32)
    slab = slab.at[R_EMB:R_EMB + VOCAB, :H].set(params["embedding"])
    slab = slab.at[R_WENC:R_WENC + H, :H].set(params["w_enc"])
    slab = slab.at[R_BENC:R_BENC + 1, :H].set(params["b_enc"])
    slab = slab.at[R_WGATE:R_WGATE + H, :E].set(params["w_gate"])
    slab = slab.at[R_BGATE:R_BGATE + 1, :E].set(params["b_gate"])
    slab = slab.at[R_WEXP:R_WEXP + H, :EH].set(w_exp_flat)
    slab = slab.at[R_BEXP:R_BEXP + 1, :EH].set(b_exp_flat)
    slab = slab.at[R_WHEAD:R_WHEAD + EH, :NUM_LABELS].set(w_head_flat)
    slab = slab.at[R_BHEAD:R_BHEAD + E, :NUM_LABELS].set(params["b_head"])
    return slab


# advisory cost estimate (f32 matmuls + tanh counts + slab bytes)
_FLOPS = 2 * (BS * VOCAB * H + B * BS * H + B * H * H + B * H * E
              + BS * H * EH + B * BS * EH + B * E * EH
              + B * EH * L_PAD + B * E * L_PAD)
_TRANS = B * H + BS * EH
_BYTES = (R_TOTAL * L_PAD + BS * L_PAD + B * L_PAD) * 4


@jax.jit
def moe_classifier_forward(input_ids, attention_mask, w_slab, gumbel):
    """input_ids: (B, S) int32, attention_mask: (B, S) int/float, gumbel: (B, E)."""
    # ---- pack ids / normalized mask / gumbel into ONE lane-dense slab -------
    mask = attention_mask.astype(jnp.float32)
    # clamp guards all-zero-mask rows (reference would produce NaN there)
    mask_norm = mask / jnp.maximum(mask.sum(-1, keepdims=True), 1.0)
    data = jnp.zeros((BS, L_PAD), jnp.float32)
    data = data.at[:, C_IDS].set(input_ids.astype(jnp.float32).reshape(BS))
    data = data.at[:, C_MASK].set(mask_norm.reshape(BS))
    data = data.at[:B, C_GUM:C_GUM + E].set(gumbel)

    vmem = pl.BlockSpec(memory_space=pltpu.MemorySpace.VMEM)
    out_pad = pl.pallas_call(
        moe_kernel,
        out_shape=jax.ShapeDtypeStruct((B, L_PAD), jnp.float32),
        in_specs=[vmem, vmem],
        out_specs=vmem,
        cost_estimate=pl.CostEstimate(flops=_FLOPS, transcendentals=_TRANS,
                                      bytes_accessed=_BYTES),
    )(data, w_slab)
    return out_pad[:, :NUM_LABELS]                               # (B, 3)


# ----------------------------- reference (pure JAX) ---------------------------
def moe_reference(input_ids, attention_mask, params, gumbel):
    x = params["embedding"][input_ids]                           # (B, S, H)
    mask = attention_mask.astype(jnp.float32)
    cls_embed = jnp.tanh(x[:, 0, :] @ params["w_enc"] + params["b_enc"])
    noisy = cls_embed @ params["w_gate"] + params["b_gate"] + gumbel
    gate = jax.nn.one_hot(jnp.argmax(noisy, axis=-1), E, dtype=jnp.float32)
    outs = []
    for e in range(E):
        h = jnp.tanh(x @ params["w_exp"][e] + params["b_exp"][e])
        pooled = (h * mask[:, :, None]).sum(1) / mask.sum(1, keepdims=True)
        outs.append(pooled @ params["w_head"][e] + params["b_head"][e])
    expert_out = jnp.stack(outs, axis=1)                         # (B, E, L)
    return (gate[:, :, None] * expert_out).sum(axis=1)


# ----------------------------- params / main ---------------------------------
def init_params(key):
    ks = jax.random.split(key, 8)
    s = 0.02
    return {
        "embedding": jax.random.normal(ks[0], (VOCAB, H), jnp.float32) * s,
        "w_enc": jax.random.normal(ks[1], (H, H), jnp.float32) * s,
        "b_enc": jnp.zeros((1, H), jnp.float32),
        "w_gate": jax.random.normal(ks[2], (H, E), jnp.float32) * s,
        "b_gate": jnp.zeros((1, E), jnp.float32),
        "w_exp": jax.random.normal(ks[3], (E, H, H), jnp.float32) * s,
        "b_exp": jax.random.normal(ks[4], (E, H), jnp.float32) * s,
        "w_head": jax.random.normal(ks[5], (E, H, NUM_LABELS), jnp.float32) * s,
        "b_head": jax.random.normal(ks[6], (E, NUM_LABELS), jnp.float32) * s,
    }


if __name__ == "__main__":
    key = jax.random.PRNGKey(0)
    k_param, k_ids, k_gumbel = jax.random.split(key, 3)

    params = init_params(k_param)
    w_slab = prepare_params(params)

    input_ids = jax.random.randint(k_ids, (B, S), 0, VOCAB, dtype=jnp.int32)
    attention_mask = jnp.concatenate(
        [jnp.ones((B, S - 2), jnp.int32), jnp.zeros((B, 2), jnp.int32)], axis=1)

    # F.gumbel_softmax noise, sampled once in JAX (deterministic) and fed to the kernel.
    u = jax.random.uniform(k_gumbel, (B, E), jnp.float32,
                           minval=1e-6, maxval=1.0 - 1e-6)
    gumbel = -jnp.log(-jnp.log(u))

    out = moe_classifier_forward(input_ids, attention_mask, w_slab, gumbel)
    out = jax.block_until_ready(out)

    ref = moe_reference(input_ids, attention_mask, params, gumbel)
    assert out.shape == (B, NUM_LABELS)
    assert jnp.allclose(out, ref, atol=2e-5, rtol=1e-4), (out, ref)

    print("KERNEL_OK")
</pallas_src>

<mosaic_0001>
module attributes {stable_mosaic.version = 11 : i64} {
  func.func @moe_kernel(%arg0: memref<16x128xf32, #tpu.memory_space<vmem>>, %arg1: memref<240x128xf32, #tpu.memory_space<vmem>>, %arg2: memref<2x128xf32, #tpu.memory_space<vmem>>) attributes {dimension_semantics = [], scalar_prefetch = 0 : i64, scratch_operands = 0 : i64, tpu.core_type = #tpu.core_type<tc>} {
    %c0 = arith.constant 0 : index
    %c0_0 = arith.constant 0 : index
    %0 = vector.load %arg0[%c0, %c0_0] : memref<16x128xf32, #tpu.memory_space<vmem>>, vector<16x1xf32>
    %1 = arith.fptosi %0 : vector<16x1xf32> to vector<16x1xi32>
    %c0_1 = arith.constant 0 : index
    %c1 = arith.constant 1 : index
    %2 = vector.load %arg0[%c0_1, %c1] : memref<16x128xf32, #tpu.memory_space<vmem>>, vector<16x1xf32>
    %c0_2 = arith.constant 0 : index
    %c4 = arith.constant 4 : index
    %3 = vector.load %arg0[%c0_2, %c4] : memref<16x128xf32, #tpu.memory_space<vmem>>, vector<2x3xf32>
    %c0_3 = arith.constant 0 : index
    %c0_4 = arith.constant 0 : index
    %4 = vector.load %arg1[%c0_3, %c0_4] : memref<240x128xf32, #tpu.memory_space<vmem>>, vector<16x32xf32>
    %c16 = arith.constant 16 : index
    %c0_5 = arith.constant 0 : index
    %5 = vector.load %arg1[%c16, %c0_5] : memref<240x128xf32, #tpu.memory_space<vmem>>, vector<32x32xf32>
    %c48 = arith.constant 48 : index
    %c0_6 = arith.constant 0 : index
    %6 = vector.load %arg1[%c48, %c0_6] : memref<240x128xf32, #tpu.memory_space<vmem>>, vector<1x32xf32>
    %c56 = arith.constant 56 : index
    %c0_7 = arith.constant 0 : index
    %7 = vector.load %arg1[%c56, %c0_7] : memref<240x128xf32, #tpu.memory_space<vmem>>, vector<32x3xf32>
    %c88 = arith.constant 88 : index
    %c0_8 = arith.constant 0 : index
    %8 = vector.load %arg1[%c88, %c0_8] : memref<240x128xf32, #tpu.memory_space<vmem>>, vector<1x3xf32>
    %c96 = arith.constant 96 : index
    %c0_9 = arith.constant 0 : index
    %9 = vector.load %arg1[%c96, %c0_9] : memref<240x128xf32, #tpu.memory_space<vmem>>, vector<32x96xf32>
    %c128 = arith.constant 128 : index
    %c0_10 = arith.constant 0 : index
    %10 = vector.load %arg1[%c128, %c0_10] : memref<240x128xf32, #tpu.memory_space<vmem>>, vector<1x96xf32>
    %c136 = arith.constant 136 : index
    %c0_11 = arith.constant 0 : index
    %11 = vector.load %arg1[%c136, %c0_11] : memref<240x128xf32, #tpu.memory_space<vmem>>, vector<96x128xf32>
    %c232 = arith.constant 232 : index
    %c0_12 = arith.constant 0 : index
    %12 = vector.load %arg1[%c232, %c0_12] : memref<240x128xf32, #tpu.memory_space<vmem>>, vector<3x128xf32>
    %13 = tpu.iota {dimensions = array<i32: 1>} : vector<16x16xi32>
    %14 = vector.broadcast %1 : vector<16x1xi32> to vector<16x16xi32>
    %15 = arith.cmpi eq, %14, %13 : vector<16x16xi32>
    %16 = arith.extui %15 : vector<16x16xi1> to vector<16x16xi32>
    %17 = arith.sitofp %16 : vector<16x16xi32> to vector<16x16xf32>
    %cst = arith.constant dense<0.000000e+00> : vector<16x32xf32>
    %18 = tpu.matmul %17, %4, %cst {dimension_numbers = #tpu.dot_dimension_numbers<[1], [0], [0], [1], [0, 0, 1, 1], [], []>} : vector<16x16xf32>, vector<16x32xf32>, vector<16x32xf32> -> vector<16x32xf32>
    %19 = tpu.iota {dimensions = array<i32: 1>} : vector<2x16xi32>
    %20 = tpu.iota {dimensions = array<i32: 0>} : vector<2x16xi32>
    %c8_i32 = arith.constant 8 : i32
    %21 = vector.broadcast %c8_i32 : i32 to vector<2x16xi32>
    %22 = arith.muli %20, %21 : vector<2x16xi32>
    %23 = arith.cmpi eq, %19, %22 : vector<2x16xi32>
    %24 = arith.extui %23 : vector<2x16xi1> to vector<2x16xi32>
    %25 = arith.sitofp %24 : vector<2x16xi32> to vector<2x16xf32>
    %c8_i32_13 = arith.constant 8 : i32
    %26 = vector.broadcast %c8_i32_13 : i32 to vector<2x16xi32>
    %27 = arith.muli %20, %26 : vector<2x16xi32>
    %28 = arith.cmpi sge, %19, %27 : vector<2x16xi32>
    %c1_i32 = arith.constant 1 : i32
    %29 = vector.broadcast %c1_i32 : i32 to vector<2x16xi32>
    %30 = arith.addi %20, %29 : vector<2x16xi32>
    %c8_i32_14 = arith.constant 8 : i32
    %31 = vector.broadcast %c8_i32_14 : i32 to vector<2x16xi32>
    %32 = arith.muli %30, %31 : vector<2x16xi32>
    %33 = arith.cmpi slt, %19, %32 : vector<2x16xi32>
    %34 = arith.andi %28, %33 : vector<2x16xi1>
    %35 = arith.extui %34 : vector<2x16xi1> to vector<2x16xi32>
    %36 = arith.sitofp %35 : vector<2x16xi32> to vector<2x16xf32>
    %37 = tpu.iota {dimensions = array<i32: 1>} : vector<3x96xi32>
    %38 = tpu.iota {dimensions = array<i32: 0>} : vector<3x96xi32>
    %c32_i32 = arith.constant 32 : i32
    %39 = vector.broadcast %c32_i32 : i32 to vector<3x96xi32>
    %40 = arith.muli %38, %39 : vector<3x96xi32>
    %41 = arith.cmpi sge, %37, %40 : vector<3x96xi32>
    %c1_i32_15 = arith.constant 1 : i32
    %42 = vector.broadcast %c1_i32_15 : i32 to vector<3x96xi32>
    %43 = arith.addi %38, %42 : vector<3x96xi32>
    %c32_i32_16 = arith.constant 32 : i32
    %44 = vector.broadcast %c32_i32_16 : i32 to vector<3x96xi32>
    %45 = arith.muli %43, %44 : vector<3x96xi32>
    %46 = arith.cmpi slt, %37, %45 : vector<3x96xi32>
    %47 = arith.andi %41, %46 : vector<3x96xi1>
    %48 = arith.extui %47 : vector<3x96xi1> to vector<3x96xi32>
    %49 = arith.sitofp %48 : vector<3x96xi32> to vector<3x96xf32>
    %cst_17 = arith.constant dense<0.000000e+00> : vector<2x32xf32>
    %50 = tpu.matmul %25, %18, %cst_17 {dimension_numbers = #tpu.dot_dimension_numbers<[1], [0], [0], [1], [0, 0, 1, 1], [], []>} : vector<2x16xf32>, vector<16x32xf32>, vector<2x32xf32> -> vector<2x32xf32>
    %cst_18 = arith.constant dense<0.000000e+00> : vector<2x32xf32>
    %51 = tpu.matmul %50, %5, %cst_18 {dimension_numbers = #tpu.dot_dimension_numbers<[1], [0], [0], [1], [0, 0, 1, 1], [], []>} : vector<2x32xf32>, vector<32x32xf32>, vector<2x32xf32> -> vector<2x32xf32>
    %52 = vector.broadcast %6 : vector<1x32xf32> to vector<2x32xf32>
    %53 = arith.addf %51, %52 : vector<2x32xf32>
    %54 = math.tanh %53 : vector<2x32xf32>
    %cst_19 = arith.constant dense<0.000000e+00> : vector<2x3xf32>
    %55 = tpu.matmul %54, %7, %cst_19 {dimension_numbers = #tpu.dot_dimension_numbers<[1], [0], [0], [1], [0, 0, 1, 1], [], []>} : vector<2x32xf32>, vector<32x3xf32>, vector<2x3xf32> -> vector<2x3xf32>
    %56 = vector.broadcast %8 : vector<1x3xf32> to vector<2x3xf32>
    %57 = arith.addf %55, %56 : vector<2x3xf32>
    %58 = arith.addf %57, %3 : vector<2x3xf32>
    %59 = tpu.iota {dimensions = array<i32: 1>} : vector<2x3xi32>
    %cst_20 = arith.constant dense<0xFF800000> : vector<2xf32>
    %60 = vector.multi_reduction <maximumf>, %58, %cst_20 [1] : vector<2x3xf32> to vector<2xf32>
    %61 = vector.shape_cast %60 : vector<2xf32> to vector<2x1xf32>
    %62 = vector.broadcast %61 : vector<2x1xf32> to vector<2x3xf32>
    %63 = arith.cmpf oeq, %58, %62 : vector<2x3xf32>
    %c3_i32 = arith.constant 3 : i32
    %64 = vector.broadcast %c3_i32 : i32 to vector<2x3xi32>
    %65 = arith.select %63, %59, %64 : vector<2x3xi1>, vector<2x3xi32>
    %cst_21 = arith.constant dense<2147483647> : vector<2xi32>
    %66 = vector.multi_reduction <minsi>, %65, %cst_21 [1] : vector<2x3xi32> to vector<2xi32>
    %67 = vector.shape_cast %66 : vector<2xi32> to vector<2x1xi32>
    %68 = vector.broadcast %67 : vector<2x1xi32> to vector<2x3xi32>
    %69 = arith.cmpi eq, %59, %68 : vector<2x3xi32>
    %70 = arith.extui %69 : vector<2x3xi1> to vector<2x3xi32>
    %71 = arith.sitofp %70 : vector<2x3xi32> to vector<2x3xf32>
    %cst_22 = arith.constant dense<0.000000e+00> : vector<16x96xf32>
    %72 = tpu.matmul %18, %9, %cst_22 {dimension_numbers = #tpu.dot_dimension_numbers<[1], [0], [0], [1], [0, 0, 1, 1], [], []>} : vector<16x32xf32>, vector<32x96xf32>, vector<16x96xf32> -> vector<16x96xf32>
    %73 = vector.broadcast %10 : vector<1x96xf32> to vector<16x96xf32>
    %74 = arith.addf %72, %73 : vector<16x96xf32>
    %75 = math.tanh %74 : vector<16x96xf32>
    %76 = vector.broadcast %2 : vector<16x1xf32> to vector<16x96xf32>
    %77 = arith.mulf %75, %76 : vector<16x96xf32>
    %cst_23 = arith.constant dense<0.000000e+00> : vector<2x96xf32>
    %78 = tpu.matmul %36, %77, %cst_23 {dimension_numbers = #tpu.dot_dimension_numbers<[1], [0], [0], [1], [0, 0, 1, 1], [], []>} : vector<2x16xf32>, vector<16x96xf32>, vector<2x96xf32> -> vector<2x96xf32>
    %cst_24 = arith.constant dense<0.000000e+00> : vector<2x96xf32>
    %79 = tpu.matmul %71, %49, %cst_24 {dimension_numbers = #tpu.dot_dimension_numbers<[1], [0], [0], [1], [0, 0, 1, 1], [], []>} : vector<2x3xf32>, vector<3x96xf32>, vector<2x96xf32> -> vector<2x96xf32>
    %80 = arith.mulf %78, %79 : vector<2x96xf32>
    %cst_25 = arith.constant dense<0.000000e+00> : vector<2x128xf32>
    %81 = tpu.matmul %80, %11, %cst_25 {dimension_numbers = #tpu.dot_dimension_numbers<[1], [0], [0], [1], [0, 0, 1, 1], [], []>} : vector<2x96xf32>, vector<96x128xf32>, vector<2x128xf32> -> vector<2x128xf32>
    %cst_26 = arith.constant dense<0.000000e+00> : vector<2x128xf32>
    %82 = tpu.matmul %71, %12, %cst_26 {dimension_numbers = #tpu.dot_dimension_numbers<[1], [0], [0], [1], [0, 0, 1, 1], [], []>} : vector<2x3xf32>, vector<3x128xf32>, vector<2x128xf32> -> vector<2x128xf32>
    %83 = arith.addf %81, %82 : vector<2x128xf32>
    %c0_27 = arith.constant 0 : index
    %c0_28 = arith.constant 0 : index
    %84 = vector.load %arg2[%c0_27, %c0_28] : memref<2x128xf32, #tpu.memory_space<vmem>>, vector<2x128xf32>
    tpu.vector_store %arg2[%c0_27, %c0_28], %83 {strides = array<i32>} : memref<2x128xf32, #tpu.memory_space<vmem>>, vector<2x128xf32>,
    return
  }
}

</mosaic_0001>

<llo_original>
// kernel: moe_classifier_forward.1
$region0: #{moe_classifier_forward.1}
  #allocation0 [shape = 'u32[]', space=smem, size = 0x4, offset = 0x4, fixed_abs, tag = 'smem constant byte address 0x4 - core index']
  #allocation1 [shape = 'u32[72,128]{1,0:T(1,128)}', space=vmem, size = 0x9000, scoped, tag = 'internal scratch']
  %s0 = inlined_call_operand.vmem [shape: f32[16,128], index: 0, kind: input, shape index: {}]
  %s1 = inlined_call_operand.hbm [shape: f32[240,128], index: 1, kind: input, shape index: {}]
  %s2 = inlined_call_operand.hbm [shape: f32[2,128], index: 2, kind: output, shape index: {}]
  %s3 = sld [smem:[#allocation0]]
  $region22: #{moe_classifier_forward.1} parent=0
    _
  %s5 = ssub.s32 1, %s3
  %s6 = scalar_select 0, %s5, %s3
  $region1: #{moe_classifier_forward.1} parent=0
    #allocation2 [shape = 'u8[122880]{0}', space=vmem, size = 0x1e000, scoped, tag = 'input window, operand 1, single buffered']
    #allocation3 [shape = 's32[1]{0}', space=sflag, size = 0x4, scoped, tag = 'scoped memory for moe_classifier_forward.1']
    #allocation4 [shape = 's32[1]{0}', space=sflag, size = 0x4, scoped, tag = 'scoped memory for moe_classifier_forward.1']
    #allocation5 [shape = 'u8[1024]{0}', space=vmem, size = 0x400, scoped, tag = 'output window, operand 0, single buffered']
    %7 = vsyncpa [#allocation3], 0
    %8 = vsyncpa [#allocation4], 0
    // Predicated region
    $region2: #{moe_classifier_forward.1} parent=1 // pred_check
      _
    $region3: #{moe_classifier_forward.1} parent=1 // pred_check_branch
      %10 = sbr.rel (0) target = $region5
    $region4: #{moe_classifier_forward.1} parent=1 // pred_region
      _
    $region5: #{moe_classifier_forward.1} parent=1 // pred_fallthru
      _
    // Predicated region
    $region6: #{moe_classifier_forward.1} parent=1 // pred_check
      _
    $region7: #{moe_classifier_forward.1} parent=1 // pred_check_branch
      %12 = sbr.rel (0) target = $region9
    $region8: #{moe_classifier_forward.1} parent=1 // pred_region
      %14 = vsyncadd [#allocation3], 0
      %s15 = sshll.u32 %s1, 4
      %s16 = int_to_ptr.hbm [resolvable:$true] %s15
      %s17 = sshll.u32 [#allocation2], 4
      %s18 = int_to_ptr.vmem [resolvable:$true] %s17
      %23 = dma.hbm_to_vmem [thread:$0]  %s16, 3840, %s18, [#allocation3], 128, 128, 8
    $region9: #{moe_classifier_forward.1} parent=1 // pred_fallthru
      _
    // Predicated region
    $region10: #{moe_classifier_forward.1} parent=1 // pred_check
      _
    $region11: #{moe_classifier_forward.1} parent=1 // pred_check_branch
      %25 = sbr.rel (0) target = $region13
    $region12: #{moe_classifier_forward.1} parent=1 // pred_region
      %27 = dma.done [#allocation3], 3840
    $region13: #{moe_classifier_forward.1} parent=1 // pred_fallthru
      _
    %v28 = vld [vmem:[%s0] sm:$0xff]
    %v29 = vld [vmem:[%s0 + $0x8] sm:$0xff]
    %v30 = vcvt.f32.s32.to.zero.pseudo %v28
    %v31 = vcvt.f32.s32.to.zero.pseudo %v29
    %v32 = vld [vmem:[%s0] sm:$0x3]
    %v33 = vld [vmem:[#allocation2] sm:$0xff]
    %v34 = vld [vmem:[#allocation2 + $0x8] sm:$0xff]
    %v35 = vld [vmem:[#allocation2 + $0x10] sm:$0xff]
    %v36 = vld [vmem:[#allocation2 + $0x18] sm:$0xff]
    %v37 = vld [vmem:[#allocation2 + $0x20] sm:$0xff]
    %v38 = vld [vmem:[#allocation2 + $0x28] sm:$0xff]
    %v39 = vld [vmem:[#allocation2 + $0x30] sm:$0x1]
    %v40 = vld [vmem:[#allocation2 + $0x38] sm:$0xff]
    %v41 = vld [vmem:[#allocation2 + $0x40] sm:$0xff]
    %v42 = vld [vmem:[#allocation2 + $0x48] sm:$0xff]
    %v43 = vld [vmem:[#allocation2 + $0x50] sm:$0xff]
    %v44 = vld [vmem:[#allocation2 + $0x58] sm:$0x1]
    %v45 = vld [vmem:[#allocation2 + $0x60] sm:$0xff]
    %v46 = vld [vmem:[#allocation2 + $0x68] sm:$0xff]
    %v47 = vld [vmem:[#allocation2 + $0x70] sm:$0xff]
    %v48 = vld [vmem:[#allocation2 + $0x78] sm:$0xff]
    %v49 = vld [vmem:[#allocation2 + $0x80] sm:$0x1]
    %v50 = vld [vmem:[#allocation2 + $0x88] sm:$0xff]
    %v51 = vld [vmem:[#allocation2 + $0x90] sm:$0xff]
    %v52 = vld [vmem:[#allocation2 + $0x98] sm:$0xff]
    %v53 = vld [vmem:[#allocation2 + $0xa0] sm:$0xff]
    %v54 = vld [vmem:[#allocation2 + $0xa8] sm:$0xff]
    %v55 = vld [vmem:[#allocation2 + $0xb0] sm:$0xff]
    %v56 = vld [vmem:[#allocation2 + $0xb8] sm:$0xff]
    %v57 = vld [vmem:[#allocation2 + $0xc0] sm:$0xff]
    %v58 = vld [vmem:[#allocation2 + $0xc8] sm:$0xff]
    %v59 = vld [vmem:[#allocation2 + $0xd0] sm:$0xff]
    %v60 = vld [vmem:[#allocation2 + $0xd8] sm:$0xff]
    %v61 = vld [vmem:[#allocation2 + $0xe0] sm:$0xff]
    %v62 = vld [vmem:[#allocation2 + $0xe8] sm:$0x7]
    %v63 = vlaneseq
    %v64 = vand.u32 %v63, 127
    %65 = vset.pattern.permute.xlu0 0
    %66 = vperm.xlu0 %65, %v30
    %v67 = vpop.permute.xlu0 %66
    %68 = vset.pattern.permute.xlu0 0
    %69 = vperm.xlu0 %68, %v31
    %v70 = vpop.permute.xlu0 %69
    %vm71 = vcmp.eq.s32.totalorder %v67, %v64
    %vm72 = vcmp.eq.s32.totalorder %v70, %v64
    %v73 = vsel %vm71, 1, 0
    %v74 = vsel %vm72, 1, 0
    %v75 = vcvt.s32.f32 %v73
    %v76 = vcvt.s32.f32 %v74
    %vm77 = vcmask 130048
    %v79 = vsel %vm77, %v75, 0
    %v82 = vsel %vm77, %v76, 0
    %84 = vmatpush.msra.mxu0 0.0
    %85 = vmatpush.msra.mxu0 0.0
    %86 = vmatpush.msra.mxu0 0.0
    %87 = vmatpush.msra.mxu0 0.0
    %88 = vmatpush.msra.mxu0 0.0
    %89 = vmatpush.msra.mxu0 0.0
    %90 = vmatpush.msra.mxu0 0.0
    %91 = vmatpush.msra.mxu0 0.0
    %92 = vmatpush.msra.mxu0 0.0
    %93 = vmatpush.msra.mxu0 0.0
    %94 = vmatpush.msra.mxu0 0.0
    %95 = vmatpush.msra.mxu0 0.0
    %96 = vmatpush.msra.mxu0 0.0
    %97 = vmatpush.msra.mxu0 0.0
    %98 = vmatpush.msra.mxu0 %v34
    %99 = vmatpush.msra.mxu0 %v33
    %100 = vmatmul.f32.gmra.mxu0 %v79
    %v101 = vpop.f32.mrf.mxu0
    %v102 = vadd.f32 0.0, %v101
    %103 = vmatmul.f32.gmra.mxu0 %v82
    %v104 = vpop.f32.mrf.mxu0
    %v105 = vadd.f32 0.0, %v104
    %106 = vdwg.mxu0
    %v107 = vlaneseq
    %v108 = vshrl.u32 %v107, 7
    %v109 = vmul.u32 %v108, 8
    %vm110 = vcmp.eq.s32.totalorder %v64, %v109
    %v111 = vsel %vm110, 1, 0
    %v112 = vcvt.s32.f32 %v111
    %vm113 = vcmp.ge.s32.totalorder %v64, %v109
    %v114 = vadd.s32 %v108, 1
    %v115 = vmul.u32 %v114, 8
    %vm116 = vcmp.lt.s32.totalorder %v64, %v115
    %vm117 = vmand %vm113, %vm116
    %v118 = vsel %vm117, 1, 0
    %v119 = vcvt.s32.f32 %v118
    %v120 = vmul.u32 %v108, 32
    %vm121 = vcmp.ge.s32.totalorder %v64, %v120
    %v122 = vmul.u32 %v114, 32
    %vm123 = vcmp.lt.s32.totalorder %v64, %v122
    %vm124 = vmand %vm121, %vm123
    %v125 = vsel %vm124, 1, 0
    %v126 = vcvt.s32.f32 %v125
    %v128 = vsel %vm77, %v112, 0
    %130 = vmatpush.msra.mxu0 0.0
    %131 = vmatpush.msra.mxu0 0.0
    %132 = vmatpush.msra.mxu0 0.0
    %133 = vmatpush.msra.mxu0 0.0
    %134 = vmatpush.msra.mxu0 0.0
    %135 = vmatpush.msra.mxu0 0.0
    %136 = vmatpush.msra.mxu0 0.0
    %137 = vmatpush.msra.mxu0 0.0
    %138 = vmatpush.msra.mxu0 0.0
    %139 = vmatpush.msra.mxu0 0.0
    %140 = vmatpush.msra.mxu0 0.0
    %141 = vmatpush.msra.mxu0 0.0
    %142 = vmatpush.msra.mxu0 0.0
    %143 = vmatpush.msra.mxu0 0.0
    %144 = vmatpush.msra.mxu0 %v105
    %145 = vmatpush.msra.mxu0 %v102
    %146 = vmatmul.f32.gmra.mxu0 %v128
    %v147 = vpop.f32.mrf.mxu0
    %v148 = vadd.f32 0.0, %v147
    %149 = vdwg.mxu0
    %v150 = vperm.slane %v39, 0
    %vm151 = vcmask 261120
    %v153 = vsel %vm151, %v148, 0
    %155 = vmatpush.msra.mxu0 0.0
    %156 = vmatpush.msra.mxu0 0.0
    %157 = vmatpush.msra.mxu0 0.0
    %158 = vmatpush.msra.mxu0 0.0
    %159 = vmatpush.msra.mxu0 0.0
    %160 = vmatpush.msra.mxu0 0.0
    %161 = vmatpush.msra.mxu0 0.0
    %162 = vmatpush.msra.mxu0 0.0
    %163 = vmatpush.msra.mxu0 0.0
    %164 = vmatpush.msra.mxu0 0.0
    %165 = vmatpush.msra.mxu0 0.0
    %166 = vmatpush.msra.mxu0 0.0
    %167 = vmatpush.msra.mxu0 %v38
    %168 = vmatpush.msra.mxu0 %v37
    %169 = vmatpush.msra.mxu0 %v36
    %170 = vmatpush.msra.mxu0 %v35
    %171 = vmatmul.f32.gmra.mxu0 %v153
    %v172 = vpop.f32.mrf.mxu0
    %v173 = vadd.f32 %v150, %v172
    %174 = vdwg.mxu0
    %v175 = vtanh.pop %v173
    %v176 = vperm.slane %v44, 0
    %v178 = vsel %vm151, %v175, 0
    %180 = vmatpush.msra.mxu0 0.0
    %181 = vmatpush.msra.mxu0 0.0
    %182 = vmatpush.msra.mxu0 0.0
    %183 = vmatpush.msra.mxu0 0.0
    %184 = vmatpush.msra.mxu0 0.0
    %185 = vmatpush.msra.mxu0 0.0
    %186 = vmatpush.msra.mxu0 0.0
    %187 = vmatpush.msra.mxu0 0.0
    %188 = vmatpush.msra.mxu0 0.0
    %189 = vmatpush.msra.mxu0 0.0
    %190 = vmatpush.msra.mxu0 0.0
    %191 = vmatpush.msra.mxu0 0.0
    %192 = vmatpush.msra.mxu0 %v43
    %193 = vmatpush.msra.mxu0 %v42
    %194 = vmatpush.msra.mxu0 %v41
    %195 = vmatpush.msra.mxu0 %v40
    %196 = vmatmul.f32.gmra.mxu0 %v178
    %v197 = vpop.f32.mrf.mxu0
    %v198 = vadd.f32 %v176, %v197
    %199 = vdwg.mxu0
    %201 = vrot.lane.b32.xlu0 %v32, 124
    %v202 = vpop.permute.xlu0 %201
    %v204 = vadd.f32 %v198, %v202
    %vm205 = vcmask 17408
    %v206 = vsel %vm205, %v204, -inf
    %207 = vmax.xlane.f32.xlu0 %v206
    %v208 = vpop.xlane.xlu0 %207
    %vm209 = vcmp.eq.f32.partialorder %v204, %v208
    %v210 = vsel %vm209, %v64, 3
    %v211 = vsel %vm205, %v210, 2147483647
    %v212 = vand.u32 %v211, 65535
    %v213 = vshra.s32 %v211, 16
    %v214 = vcvt.s32.f32 %v212
    %v215 = vcvt.s32.f32 %v213
    %216 = vmin.xlane.f32.xlu0 %v215
    %v217 = vpop.xlane.xlu0 %216
    %vm218 = vcmp.eq.f32.partialorder %v215, %v217
    %v219 = vsel %vm218, %v214, inf
    %220 = vmin.xlane.f32.xlu0 %v219
    %v221 = vpop.xlane.xlu0 %220
    %v222 = vcvt.f32.s32 %v221
    %v223 = vcvt.f32.s32 %v217
    %v224 = vshll.u32 %v223, 16
    %v225 = vadd.s32 %v224, %v222
    %vm226 = vcmp.eq.s32.totalorder %v64, %v225
    %v227 = vsel %vm226, 1, 0
    %v228 = vcvt.s32.f32 %v227
    %v229 = vperm.slane %v49, 0
    %v231 = vsel %vm151, %v102, 0
    %v234 = vsel %vm151, %v105, 0
    %236 = vmatpush.msra.mxu0 0.0
    %237 = vmatpush.msra.mxu0 0.0
    %238 = vmatpush.msra.mxu0 0.0
    %239 = vmatpush.msra.mxu0 0.0
    %240 = vmatpush.msra.mxu0 0.0
    %241 = vmatpush.msra.mxu0 0.0
    %242 = vmatpush.msra.mxu0 0.0
    %243 = vmatpush.msra.mxu0 0.0
    %244 = vmatpush.msra.mxu0 0.0
    %245 = vmatpush.msra.mxu0 0.0
    %246 = vmatpush.msra.mxu0 0.0
    %247 = vmatpush.msra.mxu0 0.0
    %248 = vmatpush.msra.mxu0 %v48
    %249 = vmatpush.msra.mxu0 %v47
    %250 = vmatpush.msra.mxu0 %v46
    %251 = vmatpush.msra.mxu0 %v45
    %252 = vmatmul.f32.gmra.mxu0 %v231
    %v253 = vpop.f32.mrf.mxu0
    %v254 = vadd.f32 %v229, %v253
    %255 = vmatmul.f32.gmra.mxu0 %v234
    %v256 = vpop.f32.mrf.mxu0
    %v257 = vadd.f32 %v229, %v256
    %258 = vdwg.mxu0
    %v259 = vtanh.pop %v254
    %v260 = vtanh.pop %v257
    %262 = vset.pattern.permute.xlu0 1
    %263 = vperm.xlu0 %262, %v28
    %v264 = vpop.permute.xlu0 %263
    %267 = vset.pattern.permute.xlu0 1
    %268 = vperm.xlu0 %267, %v29
    %v269 = vpop.permute.xlu0 %268
    %v271 = vmul.f32 %v259, %v264
    %v272 = vmul.f32 %v260, %v269
    %v274 = vsel %vm77, %v119, 0
    %276 = vmatpush.msra.mxu0 0.0
    %277 = vmatpush.msra.mxu0 0.0
    %278 = vmatpush.msra.mxu0 0.0
    %279 = vmatpush.msra.mxu0 0.0
    %280 = vmatpush.msra.mxu0 0.0
    %281 = vmatpush.msra.mxu0 0.0
    %282 = vmatpush.msra.mxu0 0.0
    %283 = vmatpush.msra.mxu0 0.0
    %284 = vmatpush.msra.mxu0 0.0
    %285 = vmatpush.msra.mxu0 0.0
    %286 = vmatpush.msra.mxu0 0.0
    %287 = vmatpush.msra.mxu0 0.0
    %288 = vmatpush.msra.mxu0 0.0
    %289 = vmatpush.msra.mxu0 0.0
    %290 = vmatpush.msra.mxu0 %v272
    %291 = vmatpush.msra.mxu0 %v271
    %292 = vmatmul.f32.gmra.mxu0 %v274
    %v293 = vpop.f32.mrf.mxu0
    %v294 = vadd.f32 0.0, %v293
    %295 = vdwg.mxu0
    %vm296 = vcmask 23552
    %v298 = vsel %vm296, %v228, 0
    %vm300 = vcmask 1042432
    %v302 = vsel %vm300, %v126, 0
    %304 = vmatpush.msra.mxu0 0.0
    %305 = vmatpush.msra.mxu0 0.0
    %306 = vmatpush.msra.mxu0 0.0
    %307 = vmatpush.msra.mxu0 0.0
    %308 = vmatpush.msra.mxu0 0.0
    %309 = vmatpush.msra.mxu0 0.0
    %310 = vmatpush.msra.mxu0 0.0
    %311 = vmatpush.msra.mxu0 0.0
    %312 = vmatpush.msra.mxu0 0.0
    %313 = vmatpush.msra.mxu0 0.0
    %314 = vmatpush.msra.mxu0 0.0
    %315 = vmatpush.msra.mxu0 0.0
    %316 = vmatpush.msra.mxu0 0.0
    %317 = vmatpush.msra.mxu0 0.0
    %318 = vmatpush.msra.mxu0 0.0
    %319 = vmatpush.msra.mxu0 %v302
    %320 = vmatmul.f32.gmra.mxu0 %v298
    %v321 = vpop.f32.mrf.mxu0
    %v322 = vadd.f32 0.0, %v321
    %323 = vdwg.mxu0
    %v324 = vmul.f32 %v294, %v322
    %v326 = vsel %vm300, %v62, 0
    %328 = vmatpush.msra.mxu0 0.0
    %329 = vmatpush.msra.mxu0 0.0
    %330 = vmatpush.msra.mxu0 0.0
    %331 = vmatpush.msra.mxu0 0.0
    %332 = vmatpush.msra.mxu0 0.0
    %333 = vmatpush.msra.mxu0 0.0
    %334 = vmatpush.msra.mxu0 0.0
    %335 = vmatpush.msra.mxu0 0.0
    %336 = vmatpush.msra.mxu0 0.0
    %337 = vmatpush.msra.mxu0 0.0
    %338 = vmatpush.msra.mxu0 0.0
    %339 = vmatpush.msra.mxu0 0.0
    %340 = vmatpush.msra.mxu0 0.0
    %341 = vmatpush.msra.mxu0 0.0
    %342 = vmatpush.msra.mxu0 0.0
    %343 = vmatpush.msra.mxu0 %v326
    %344 = vmatmul.f32.gmra.mxu0 %v298
    %v345 = vpop.f32.mrf.mxu0
    %v346 = vadd.f32 0.0, %v345
    %347 = vdwg.mxu0
    %vm348 = vcmask 785408
    %v350 = vsel %vm348, %v324, 0
    %352 = vmatpush.msra.mxu0 0.0
    %353 = vmatpush.msra.mxu0 0.0
    %354 = vmatpush.msra.mxu0 0.0
    %355 = vmatpush.msra.mxu0 0.0
    %356 = vmatpush.msra.mxu0 %v61
    %357 = vmatpush.msra.mxu0 %v60
    %358 = vmatpush.msra.mxu0 %v59
    %359 = vmatpush.msra.mxu0 %v58
    %360 = vmatpush.msra.mxu0 %v57
    %361 = vmatpush.msra.mxu0 %v56
    %362 = vmatpush.msra.mxu0 %v55
    %363 = vmatpush.msra.mxu0 %v54
    %364 = vmatpush.msra.mxu0 %v53
    %365 = vmatpush.msra.mxu0 %v52
    %366 = vmatpush.msra.mxu0 %v51
    %367 = vmatpush.msra.mxu0 %v50
    %368 = vmatmul.f32.gmra.mxu0 %v350
    %v369 = vpop.f32.mrf.mxu0
    %v370 = vadd.f32 %v346, %v369
    %371 = vdwg.mxu0
    %372 = vst [vmem:[#allocation5] sm:$0x3] %v370
    // Predicated region
    $region14: #{moe_classifier_forward.1} parent=1 // pred_check
      _
    $region15: #{moe_classifier_forward.1} parent=1 // pred_check_branch
      %374 = sbr.rel (0) target = $region17
    $region16: #{moe_classifier_forward.1} parent=1 // pred_region
      %376 = vsyncadd [#allocation4], 0
      %s378 = sshll.u32 [#allocation5], 4
      %s379 = int_to_ptr.vmem [resolvable:$true] %s378
      %s380 = sshll.u32 %s2, 4
      %s381 = int_to_ptr.hbm [resolvable:$true] %s380
      %383 = dma.vmem_to_hbm [thread:$0]  %s379, 32, %s381, [#allocation4]
    $region17: #{moe_classifier_forward.1} parent=1 // pred_fallthru
      _
    // Predicated region
    $region18: #{moe_classifier_forward.1} parent=1 // pred_check
      _
    $region19: #{moe_classifier_forward.1} parent=1 // pred_check_branch
      %385 = sbr.rel (0) target = $region21
    $region20: #{moe_classifier_forward.1} parent=1 // pred_region
      %387 = dma.done [#allocation4], 32
    $region21: #{moe_classifier_forward.1} parent=1 // pred_fallthru
      _
    %388 = vsyncpa [#allocation3], 1
    %389 = vsyncpa [#allocation4], 1

</llo_original>
